<compile_context>
chip_gen: v5e
topology: v5e:2x2
jax: 0.10.0
libtpu: 0.0.40
codegen_flags: <defaults>
</compile_context>

<pallas_src>
import functools

import jax
import jax.numpy as jnp
from jax import lax
from jax.experimental import pallas as pl
from jax.experimental.pallas import tpu as pltpu


def _round_up(v, m):
    return ((v + m - 1) // m) * m


def _binarizer_kernel(x_ref, a_ref, thr_ref, pass_ref, flip_ref, out_ref, *, D, TC):
    """One (batch tile, output-column chunk) step.

    x_ref:    (TB, F)   input rows (any float dtype; upcast below)
    a_ref:    (F, TC)   one-hot column-select matrix for this column chunk
    thr_ref:  (1, TC)   per-output-column bin-center threshold
    pass_ref: (1, TC)   1.0 where the column is a discrete pass-through column
    flip_ref: (1, TC)   1.0 where the column is a (1 - bins) column
    out_ref:  (TB, TC)  output chunk
    """
    xv = x_ref[...].astype(jnp.float32)
    # Exact one-hot select on the MXU. HIGHEST => operands are not truncated to
    # bf16, so the compare against bin centers matches the f32 reference.
    val = jnp.dot(xv, a_ref[...],
                  precision=lax.Precision.HIGHEST,
                  preferred_element_type=jnp.float32)
    bins = (val > thr_ref[...]).astype(jnp.float32)
    # flip == 1 -> (1 - bins); pass == 1 -> raw selected value (discrete cols).
    sel = flip_ref[...] + (1.0 - 2.0 * flip_ref[...]) * bins
    res = pass_ref[...] * val + (1.0 - pass_ref[...]) * sel
    # Single dense, lane-aligned store of the whole chunk.
    out_ref[...] = res.astype(out_ref.dtype)

    if D > 0:
        # Bit-exact discrete pass-through (tiny masked overwrite, first column
        # chunk only). Columns 0..D-1 sit at identical lane offsets in x and out.
        Dc = min(D, TC)

        @pl.when(pl.program_id(0) == 0)
        def _():
            out_ref[:, 0:Dc] = x_ref[:, 0:Dc].astype(out_ref.dtype)


def _vmem_budget_and_limit():
    """Generation-aware VMEM numbers (v5e/v6e: 128 MiB, v7x: 64 MiB)."""
    cap = None
    try:
        info = pltpu.get_tpu_info()
        for name in ("vmem_capacity_bytes", "vmem_size_bytes", "vmem_bytes"):
            cap = getattr(info, name, None)
            if cap:
                break
    except Exception:
        cap = None
    if not cap:
        cap = 64 * 1024 * 1024          # conservative fallback (v7x per-core VMEM)
    cap = int(cap)
    budget = int(cap * 0.55)            # what the tile-size heuristic may plan for
    limit = int(cap * 0.75)             # scoped VMEM ceiling handed to Mosaic
    return budget, limit


def _pick_tiles(B, F, out_dim, vmem_budget, block_rows=None, block_cols=None):
    """Pick (batch-tile rows TB, output-column chunk TC, #column chunks)."""
    # Column chunk: full width when modest (single chunk, full-dim block is
    # always legal), otherwise a lane-dense multiple of 128.
    if block_cols is not None:
        TC = int(block_cols)
    elif out_dim <= 2048:
        TC = out_dim
    else:
        TC = 2048
    # Shrink the chunk if the select-matrix block alone would eat the budget.
    while TC >= 256 and TC % 128 == 0 and 8 * F * TC > vmem_budget // 3:
        TC //= 2
    ncc = pl.cdiv(out_dim, TC)

    if block_rows is not None:
        TB = int(block_rows)
    else:
        # Double-buffered constants (select matrix + 3 row vectors).
        const_bytes = 2 * (F * TC + 3 * TC) * 4
        # Per row: 2x x tile + 2x out tile + ~3 live (TB, TC) intermediates.
        per_row = 4 * (2 * F + 5 * TC)
        TB = (vmem_budget - const_bytes) // max(per_row, 1)
        TB = max(8, min(1024, (TB // 8) * 8))          # roofline knee ~512-1024 rows
        if B >= 16:
            # Guarantee >=2 batch steps so megacore (v7x) can split the grid.
            TB = min(TB, _round_up(pl.cdiv(B, 2), 8))
        TB = min(TB, _round_up(B, 8))
    return TB, TC, ncc


def _build_select_constants(bin_centers, D, C, K, width_pad):
    """Per-output-column select matrix + thresholds + masks (tiny, plain JAX)."""
    F = D + C
    CK = C * K
    o = jnp.arange(width_pad, dtype=jnp.int32)
    is_disc = o < D
    is_bin = (o >= D) & (o < D + CK)
    is_neg = (o >= D + CK) & (o < D + 2 * CK)
    valid = is_disc | is_bin | is_neg
    rel = jnp.where(is_neg, o - (D + CK), o - D)          # index into flattened (c*K+k)
    rel = jnp.clip(rel, 0, CK - 1)
    c = rel // K
    src = jnp.where(is_disc, o, D + c)                    # x column feeding this out column
    src = jnp.where(valid, src, -1)
    A = (jnp.arange(F, dtype=jnp.int32)[:, None] == src[None, :]).astype(jnp.float32)
    centers_flat = jnp.transpose(bin_centers).reshape(-1).astype(jnp.float32)  # [c*K+k]
    thr = jnp.where(is_bin | is_neg, jnp.take(centers_flat, rel), 0.0)
    return (A,
            thr.astype(jnp.float32)[None, :],
            is_disc.astype(jnp.float32)[None, :],
            is_neg.astype(jnp.float32)[None, :])


def feature_binarizer_forward(x, bin_centers, num_discrete, *,
                              block_rows=None, block_cols=None,
                              out_dtype=jnp.float32):
    """JAX wrapper matching FeatureBinarizer.forward.

    x:            (B, D + C) float32 (or bf16; upcast happens in-kernel)
    bin_centers:  (K, C)     the module's `bin_centers` parameter
    num_discrete: D = input_shape[0]
    out_dtype:    float32 for torch parity; bf16 halves output HBM traffic
                  (bins are exact 0/1) but is not bit-identical for arbitrary
                  discrete float values.
    """
    B, F = x.shape
    D = int(num_discrete)
    C = F - D
    if C <= 0:
        # Module returns the input unchanged when there are no continuous features.
        return x
    K = bin_centers.shape[0]
    CK = C * K
    out_dim = D + 2 * CK

    vmem_budget, vmem_limit = _vmem_budget_and_limit()
    TB, TC, ncc = _pick_tiles(B, F, out_dim, vmem_budget, block_rows, block_cols)
    width_pad = ncc * TC

    A, thr, pass_row, flip_row = _build_select_constants(bin_centers, D, C, K, width_pad)

    nb = pl.cdiv(B, TB)
    # Column-chunk axis outer (constants re-DMA'd only ncc times; the small x
    # tile is re-fetched per step, but input traffic is ~2K x smaller than output).
    grid = (ncc, nb)
    kernel = functools.partial(_binarizer_kernel, D=D, TC=TC)

    out = pl.pallas_call(
        kernel,
        out_shape=jax.ShapeDtypeStruct((B, out_dim), out_dtype),
        grid_spec=pltpu.PrefetchScalarGridSpec(
            num_scalar_prefetch=0,
            grid=grid,
            in_specs=[
                pl.BlockSpec((TB, F), lambda jc, ib: (ib, 0)),   # batch tile of x
                pl.BlockSpec((F, TC), lambda jc, ib: (0, jc)),   # select matrix chunk
                pl.BlockSpec((1, TC), lambda jc, ib: (0, jc)),   # thresholds
                pl.BlockSpec((1, TC), lambda jc, ib: (0, jc)),   # pass-through mask
                pl.BlockSpec((1, TC), lambda jc, ib: (0, jc)),   # flip (1-bins) mask
            ],
            out_specs=pl.BlockSpec((TB, TC), lambda jc, ib: (ib, jc)),
        ),
        compiler_params=pltpu.CompilerParams(
            dimension_semantics=("parallel", "parallel"),
            vmem_limit_bytes=vmem_limit,
        ),
    )(x, A, thr, pass_row, flip_row)
    return out


def _reference_forward(x, bin_centers, num_discrete):
    """Pure-jnp reference mirroring the PyTorch forward, for verification."""
    D = num_discrete
    disc = x[:, :D]
    cont = x[:, D:][:, :, None]                       # (B, C, 1)
    diff = cont - bin_centers.T[None, :, :]           # (B, C, K)
    bins = (jax.nn.sigmoid(diff) > 0.5).astype(jnp.float32)
    bins = bins.reshape(x.shape[0], -1)               # (B, C*K)
    return jnp.concatenate([disc, bins, 1.0 - bins], axis=1)


if __name__ == "__main__":
    # Small shapes: input_shape = (D, C) = (4, 6), num_bins = 3, batch = 32.
    D, C, K, B = 4, 6, 3, 32

    key = jax.random.PRNGKey(0)
    k_x, k_centers = jax.random.split(key)

    # Snap demo values to a coarse 1/64 grid (centers offset by 1/128) so no
    # comparison lands near a floating-point tie -- keeps the check deterministic
    # w.r.t. torch's `sigmoid(diff) > 0.5` vs the kernel's `diff > 0` edge case.
    def snap(a):
        return jnp.clip(jnp.round(a * 64.0) / 64.0, -3.984375, 3.984375)

    bin_centers = snap(jax.random.normal(k_centers, (K, C), dtype=jnp.float32)) + (1.0 / 128.0)

    x_raw = jax.random.normal(k_x, (B, D + C), dtype=jnp.float32)
    x_disc = (x_raw[:, :D] > 0).astype(jnp.float32)   # realistic 0/1 discrete block
    x_cont = snap(x_raw[:, D:])
    x = jnp.concatenate([x_disc, x_cont], axis=1)

    expected = _reference_forward(x, bin_centers, num_discrete=D)

    # 1) Default heuristic tiling (exercises the VMEM/TC/TB selection path).
    out = feature_binarizer_forward(x, bin_centers, num_discrete=D)
    out = jax.block_until_ready(out)
    assert out.shape == (B, D + 2 * K * C), out.shape
    assert jnp.allclose(out, expected), "mismatch vs reference forward (default tiling)"

    # 2) Forced small batch tile -> multi-step pipelined grid (1 col chunk x 4 batch tiles).
    out2 = feature_binarizer_forward(x, bin_centers, num_discrete=D, block_rows=8)
    out2 = jax.block_until_ready(out2)
    assert jnp.allclose(out2, expected), "mismatch vs reference forward (block_rows=8)"

    print("KERNEL_OK")
</pallas_src>

<mosaic_0001>
module attributes {stable_mosaic.version = 11 : i64} {
  func.func @_binarizer_kernel(%arg0: i32, %arg1: i32, %arg2: memref<16x10xf32, #tpu.memory_space<vmem>>, %arg3: memref<10x40xf32, #tpu.memory_space<vmem>>, %arg4: memref<1x40xf32, #tpu.memory_space<vmem>>, %arg5: memref<1x40xf32, #tpu.memory_space<vmem>>, %arg6: memref<1x40xf32, #tpu.memory_space<vmem>>, %arg7: memref<16x40xf32, #tpu.memory_space<vmem>>) attributes {dimension_semantics = [#tpu.dimension_semantics<parallel>, #tpu.dimension_semantics<parallel>], iteration_bounds = array<i64: 1, 2>, scalar_prefetch = 0 : i64, scratch_operands = 0 : i64, tpu.core_type = #tpu.core_type<tc>, window_params = [{transform_indices = @transform_0, window_bounds = array<i64: 16, 10>}, {transform_indices = @transform_1, window_bounds = array<i64: 10, 40>}, {transform_indices = @transform_2, window_bounds = array<i64: 1, 40>}, {transform_indices = @transform_3, window_bounds = array<i64: 1, 40>}, {transform_indices = @transform_4, window_bounds = array<i64: 1, 40>}, {transform_indices = @transform_5, window_bounds = array<i64: 16, 40>}]} {
    %c0 = arith.constant 0 : index
    %c0_0 = arith.constant 0 : index
    %0 = vector.load %arg2[%c0, %c0_0] : memref<16x10xf32, #tpu.memory_space<vmem>>, vector<16x10xf32>
    %c0_1 = arith.constant 0 : index
    %c0_2 = arith.constant 0 : index
    %1 = vector.load %arg3[%c0_1, %c0_2] : memref<10x40xf32, #tpu.memory_space<vmem>>, vector<10x40xf32>
    %cst = arith.constant dense<0.000000e+00> : vector<16x40xf32>
    %2 = tpu.matmul %0, %1, %cst {dimension_numbers = #tpu.dot_dimension_numbers<[1], [0], [0], [1], [0, 0, 1, 1], [], []>, precision = #tpu.contract_precision<fp32>} : vector<16x10xf32>, vector<10x40xf32>, vector<16x40xf32> -> vector<16x40xf32>
    %c0_3 = arith.constant 0 : index
    %c0_4 = arith.constant 0 : index
    %3 = vector.load %arg4[%c0_3, %c0_4] : memref<1x40xf32, #tpu.memory_space<vmem>>, vector<1x40xf32>
    %4 = vector.broadcast %3 : vector<1x40xf32> to vector<16x40xf32>
    %5 = arith.cmpf ogt, %2, %4 : vector<16x40xf32>
    %6 = arith.extui %5 : vector<16x40xi1> to vector<16x40xi32>
    %7 = arith.sitofp %6 : vector<16x40xi32> to vector<16x40xf32>
    %c0_5 = arith.constant 0 : index
    %c0_6 = arith.constant 0 : index
    %8 = vector.load %arg6[%c0_5, %c0_6] : memref<1x40xf32, #tpu.memory_space<vmem>>, vector<1x40xf32>
    %c0_7 = arith.constant 0 : index
    %c0_8 = arith.constant 0 : index
    %9 = vector.load %arg6[%c0_7, %c0_8] : memref<1x40xf32, #tpu.memory_space<vmem>>, vector<1x40xf32>
    %cst_9 = arith.constant 2.000000e+00 : f32
    %10 = vector.broadcast %cst_9 : f32 to vector<1x40xf32>
    %11 = arith.mulf %10, %9 : vector<1x40xf32>
    %cst_10 = arith.constant 1.000000e+00 : f32
    %12 = vector.broadcast %cst_10 : f32 to vector<1x40xf32>
    %13 = arith.subf %12, %11 : vector<1x40xf32>
    %14 = vector.broadcast %13 : vector<1x40xf32> to vector<16x40xf32>
    %15 = arith.mulf %14, %7 : vector<16x40xf32>
    %16 = vector.broadcast %8 : vector<1x40xf32> to vector<16x40xf32>
    %17 = arith.addf %16, %15 : vector<16x40xf32>
    %c0_11 = arith.constant 0 : index
    %c0_12 = arith.constant 0 : index
    %18 = vector.load %arg5[%c0_11, %c0_12] : memref<1x40xf32, #tpu.memory_space<vmem>>, vector<1x40xf32>
    %19 = vector.broadcast %18 : vector<1x40xf32> to vector<16x40xf32>
    %20 = arith.mulf %19, %2 : vector<16x40xf32>
    %c0_13 = arith.constant 0 : index
    %c0_14 = arith.constant 0 : index
    %21 = vector.load %arg5[%c0_13, %c0_14] : memref<1x40xf32, #tpu.memory_space<vmem>>, vector<1x40xf32>
    %cst_15 = arith.constant 1.000000e+00 : f32
    %22 = vector.broadcast %cst_15 : f32 to vector<1x40xf32>
    %23 = arith.subf %22, %21 : vector<1x40xf32>
    %24 = vector.broadcast %23 : vector<1x40xf32> to vector<16x40xf32>
    %25 = arith.mulf %24, %17 : vector<16x40xf32>
    %26 = arith.addf %20, %25 : vector<16x40xf32>
    %c0_16 = arith.constant 0 : index
    %c0_17 = arith.constant 0 : index
    %27 = vector.load %arg7[%c0_16, %c0_17] : memref<16x40xf32, #tpu.memory_space<vmem>>, vector<16x40xf32>
    tpu.vector_store %arg7[%c0_16, %c0_17], %26 {strides = array<i32>} : memref<16x40xf32, #tpu.memory_space<vmem>>, vector<16x40xf32>,
    %c0_i32 = arith.constant 0 : i32
    %28 = arith.cmpi eq, %arg0, %c0_i32 : i32
    %29 = arith.extui %28 : i1 to i32
    %c0_i32_18 = arith.constant 0 : i32
    %30 = arith.cmpi ne, %29, %c0_i32_18 : i32
    scf.if %30 {
      %c0_19 = arith.constant 0 : index
      %c0_20 = arith.constant 0 : index
      %31 = vector.load %arg2[%c0_19, %c0_20] : memref<16x10xf32, #tpu.memory_space<vmem>>, vector<16x4xf32>
      %c0_21 = arith.constant 0 : index
      %c0_22 = arith.constant 0 : index
      %32 = vector.load %arg7[%c0_21, %c0_22] : memref<16x40xf32, #tpu.memory_space<vmem>>, vector<16x4xf32>
      tpu.vector_store %arg7[%c0_21, %c0_22], %31 {strides = array<i32>} : memref<16x40xf32, #tpu.memory_space<vmem>>, vector<16x4xf32>,
    } else {
    }
    return
  }
  func.func @transform_0(%arg0: i32, %arg1: i32) -> (i32, i32) {
    %c0_i32 = arith.constant 0 : i32
    %c0_i32_0 = arith.constant 0 : i32
    return %arg1, %c0_i32 : i32, i32
  }
  func.func @transform_1(%arg0: i32, %arg1: i32) -> (i32, i32) {
    %c0_i32 = arith.constant 0 : i32
    %c0_i32_0 = arith.constant 0 : i32
    return %c0_i32, %arg0 : i32, i32
  }
  func.func @transform_2(%arg0: i32, %arg1: i32) -> (i32, i32) {
    %c0_i32 = arith.constant 0 : i32
    %c0_i32_0 = arith.constant 0 : i32
    return %c0_i32, %arg0 : i32, i32
  }
  func.func @transform_3(%arg0: i32, %arg1: i32) -> (i32, i32) {
    %c0_i32 = arith.constant 0 : i32
    %c0_i32_0 = arith.constant 0 : i32
    return %c0_i32, %arg0 : i32, i32
  }
  func.func @transform_4(%arg0: i32, %arg1: i32) -> (i32, i32) {
    %c0_i32 = arith.constant 0 : i32
    %c0_i32_0 = arith.constant 0 : i32
    return %c0_i32, %arg0 : i32, i32
  }
  func.func @transform_5(%arg0: i32, %arg1: i32) -> (i32, i32) {
    %c0_i32 = arith.constant 0 : i32
    return %arg1, %arg0 : i32, i32
  }
}

</mosaic_0001>

<llo_original>
// kernel: tpu_custom_call.1
$region0: #{tpu_custom_call.1}
  #allocation0 [shape = 'u32[]', space=smem, size = 0x4, offset = 0x4, fixed_abs, tag = 'smem constant byte address 0x4 - core index']
  #allocation1 [shape = 'u32[72,128]{1,0:T(1,128)}', space=vmem, size = 0x9000, scoped, tag = 'internal scratch']
  %s0 = inlined_call_operand.vmem [shape: f32[32,10], index: 0, kind: input, shape index: {}]
  %s1 = inlined_call_operand.vmem [shape: f32[10,40], index: 1, kind: input, shape index: {}]
  %s2 = inlined_call_operand.vmem [shape: f32[1,40], index: 2, kind: input, shape index: {}]
  %s3 = inlined_call_operand.vmem [shape: f32[1,40], index: 3, kind: input, shape index: {}]
  %s4 = inlined_call_operand.vmem [shape: f32[1,40], index: 4, kind: input, shape index: {}]
  %s5 = inlined_call_operand.hbm [shape: f32[32,40], index: 5, kind: output, shape index: {}]
  %s6 = sld [smem:[#allocation0]]
  $region57: #{tpu_custom_call.1} parent=0
    _
  %s8 = ssub.s32 1, %s6
  %s9 = scalar_select 0, %s8, %s6
  $region1: #{tpu_custom_call.1} parent=0
    #allocation2 [shape = 'u8[16384]{0}', space=vmem, size = 0x4000, scoped, tag = 'output window, operand 0']
    #allocation3 [shape = 's32[2]{0}', space=sflag, size = 0x8, scoped, tag = 'scoped memory for tpu_custom_call.1']
    %10 = vsyncpa [#allocation3], 0
    %s11 = scalar_lea.sflag [#allocation3], 1
    %12 = vsyncpa %s11, 0
    loop: start=0, step=1, limit=4
    $region2: #{tpu_custom_call.1} parent=1 // loop_pre_header
      _
    $region3: #{tpu_custom_call.1} parent=1 // loop_header
      %s14 = sphi 0, %s18
      %p15 = scmp.ge.s32.totalorder %s14, 4
      %s21 = sphi 0, %s33
      %s22 = sphi 0, %s29
      %s23 = sphi 0, %s21
      %s24 = sphi 0, %s22
      %s25 = sphi 0, %s23
      %s26 = sphi 0, %s24
      %s36 = sphi 0, %s38
      %s39 = sphi 0, %s36
      %s40 = sphi 0, %s39
      %s56 = sphi 0, %s40
      %s62 = sphi 0, %s64
      %s65 = sphi 0, %s62
      %s66 = sphi 0, %s65
      %s82 = sphi 0, %s66
      %s88 = sphi 0, %s90
      %s91 = sphi 0, %s88
      %s92 = sphi 0, %s91
      %s108 = sphi 0, %s92
      %s114 = sphi 0, %s116
      %s117 = sphi 0, %s114
      %s118 = sphi 0, %s117
      %s134 = sphi 0, %s118
      %s140 = sphi 0, %s142
      %s143 = sphi 0, %s140
      %s144 = sphi 0, %s143
      %s160 = sphi 0, %s144
      %s168 = sphi 0, %s170
      %s171 = sphi 0, %s168
      %s172 = sphi 0, %s171
      %s188 = sphi 0, %s172
    $region4: #{tpu_custom_call.1} parent=1 // loop_header_branch
      %17 = sbr.rel (%p15) target = $region8
    $region5: #{tpu_custom_call.1} parent=1 // loop_body
      %s19 = ssub.s32 %s14, 1
      %s20 = ssub.s32 %s14, 2
      %s27 = sadd.s32 1, %s22
      %p28 = scmp.ge.s32.totalorder %s27, 2
      %s29 = scalar_select %p28, 0, %s27
      %s30 = sadd.s32 1, %s21
      %s31 = scalar_select %p28, %s30, %s21
      %p32 = scmp.ge.s32.totalorder %s31, 1
      %s33 = scalar_select %p32, 0, %s31
      %s34 = ssub.s32 %s22, %s29
      %p35 = scmp.eq.s32.totalorder %s34, 0
      %s37 = sadd.s32 %s36, 1
      %s38 = scalar_select %p35, %s36, %s37
      %p41 = pneg %p35
      %p42 = scmp.eq.s32.totalorder %s14, 1
      %p43 = por %p41, %p42
      %p44 = scmp.ne.s32.totalorder %s36, %s39
      %p45 = scmp.eq.s32.totalorder %s14, 0
      %p46 = por %p44, %p45
      %p47 = scmp.ne.s32.totalorder %s36, %s39
      %p48 = scmp.eq.s32.totalorder %s19, 1
      %p49 = por %p47, %p48
      %p50 = scmp.ne.s32.totalorder %s39, %s40
      %p51 = scmp.eq.s32.totalorder %s19, 0
      %p52 = por %p50, %p51
      %p53 = scmp.ne.s32.totalorder %s39, %s40
      %p54 = scmp.eq.s32.totalorder %s20, 1
      %p55 = por %p53, %p54
      %p57 = scmp.ne.s32.totalorder %s40, %s56
      %p58 = scmp.eq.s32.totalorder %s20, 0
      %p59 = por %p57, %p58
      %s60 = ssub.s32 %s21, %s33
      %p61 = scmp.eq.s32.totalorder %s60, 0
      %s63 = sadd.s32 %s62, 1
      %s64 = scalar_select %p61, %s62, %s63
      %p67 = pneg %p61
      %p68 = scmp.eq.s32.totalorder %s14, 1
      %p69 = por %p67, %p68
      %p70 = scmp.ne.s32.totalorder %s62, %s65
      %p71 = scmp.eq.s32.totalorder %s14, 0
      %p72 = por %p70, %p71
      %p73 = scmp.ne.s32.totalorder %s62, %s65
      %p74 = scmp.eq.s32.totalorder %s19, 1
      %p75 = por %p73, %p74
      %p76 = scmp.ne.s32.totalorder %s65, %s66
      %p77 = scmp.eq.s32.totalorder %s19, 0
      %p78 = por %p76, %p77
      %p79 = scmp.ne.s32.totalorder %s65, %s66
      %p80 = scmp.eq.s32.totalorder %s20, 1
      %p81 = por %p79, %p80
      %p83 = scmp.ne.s32.totalorder %s66, %s82
      %p84 = scmp.eq.s32.totalorder %s20, 0
      %p85 = por %p83, %p84
      %s86 = ssub.s32 %s21, %s33
      %p87 = scmp.eq.s32.totalorder %s86, 0
      %s89 = sadd.s32 %s88, 1
      %s90 = scalar_select %p87, %s88, %s89
      %p93 = pneg %p87
      %p94 = scmp.eq.s32.totalorder %s14, 1
      %p95 = por %p93, %p94
      %p96 = scmp.ne.s32.totalorder %s88, %s91
      %p97 = scmp.eq.s32.totalorder %s14, 0
      %p98 = por %p96, %p97
      %p99 = scmp.ne.s32.totalorder %s88, %s91
      %p100 = scmp.eq.s32.totalorder %s19, 1
      %p101 = por %p99, %p100
      %p102 = scmp.ne.s32.totalorder %s91, %s92
      %p103 = scmp.eq.s32.totalorder %s19, 0
      %p104 = por %p102, %p103
      %p105 = scmp.ne.s32.totalorder %s91, %s92
      %p106 = scmp.eq.s32.totalorder %s20, 1
      %p107 = por %p105, %p106
      %p109 = scmp.ne.s32.totalorder %s92, %s108
      %p110 = scmp.eq.s32.totalorder %s20, 0
      %p111 = por %p109, %p110
      %s112 = ssub.s32 %s21, %s33
      %p113 = scmp.eq.s32.totalorder %s112, 0
      %s115 = sadd.s32 %s114, 1
      %s116 = scalar_select %p113, %s114, %s115
      %p119 = pneg %p113
      %p120 = scmp.eq.s32.totalorder %s14, 1
      %p121 = por %p119, %p120
      %p122 = scmp.ne.s32.totalorder %s114, %s117
      %p123 = scmp.eq.s32.totalorder %s14, 0
      %p124 = por %p122, %p123
      %p125 = scmp.ne.s32.totalorder %s114, %s117
      %p126 = scmp.eq.s32.totalorder %s19, 1
      %p127 = por %p125, %p126
      %p128 = scmp.ne.s32.totalorder %s117, %s118
      %p129 = scmp.eq.s32.totalorder %s19, 0
      %p130 = por %p128, %p129
      %p131 = scmp.ne.s32.totalorder %s117, %s118
      %p132 = scmp.eq.s32.totalorder %s20, 1
      %p133 = por %p131, %p132
      %p135 = scmp.ne.s32.totalorder %s118, %s134
      %p136 = scmp.eq.s32.totalorder %s20, 0
      %p137 = por %p135, %p136
      %s138 = ssub.s32 %s21, %s33
      %p139 = scmp.eq.s32.totalorder %s138, 0
      %s141 = sadd.s32 %s140, 1
      %s142 = scalar_select %p139, %s140, %s141
      %p145 = pneg %p139
      %p146 = scmp.eq.s32.totalorder %s14, 1
      %p147 = por %p145, %p146
      %p148 = scmp.ne.s32.totalorder %s140, %s143
      %p149 = scmp.eq.s32.totalorder %s14, 0
      %p150 = por %p148, %p149
      %p151 = scmp.ne.s32.totalorder %s140, %s143
      %p152 = scmp.eq.s32.totalorder %s19, 1
      %p153 = por %p151, %p152
      %p154 = scmp.ne.s32.totalorder %s143, %s144
      %p155 = scmp.eq.s32.totalorder %s19, 0
      %p156 = por %p154, %p155
      %p157 = scmp.ne.s32.totalorder %s143, %s144
      %p158 = scmp.eq.s32.totalorder %s20, 1
      %p159 = por %p157, %p158
      %p161 = scmp.ne.s32.totalorder %s144, %s160
      %p162 = scmp.eq.s32.totalorder %s20, 0
      %p163 = por %p161, %p162
      %s164 = ssub.s32 %s22, %s29
      %s165 = ssub.s32 %s21, %s33
      %s166 = sor.u32 %s164, %s165
      %p167 = scmp.eq.s32.totalorder %s166, 0
      %s169 = sadd.s32 %s168, 1
      %s170 = scalar_select %p167, %s168, %s169
      %p173 = pneg %p167
      %p174 = scmp.eq.s32.totalorder %s14, 1
      %p175 = por %p173, %p174
      %p176 = scmp.ne.s32.totalorder %s168, %s171
      %p177 = scmp.eq.s32.totalorder %s14, 0
      %p178 = por %p176, %p177
      %p179 = scmp.ne.s32.totalorder %s168, %s171
      %p180 = scmp.eq.s32.totalorder %s19, 1
      %p181 = por %p179, %p180
      %p182 = scmp.ne.s32.totalorder %s171, %s172
      %p183 = scmp.eq.s32.totalorder %s19, 0
      %p184 = por %p182, %p183
      %p185 = scmp.ne.s32.totalorder %s171, %s172
      %p186 = scmp.eq.s32.totalorder %s20, 1
      %p187 = por %p185, %p186
      %p189 = scmp.ne.s32.totalorder %s172, %s188
      %p190 = scmp.eq.s32.totalorder %s20, 0
      %p191 = por %p189, %p190
      %p192 = scmp.le.s32.totalorder 1, %s14
      %p193 = scmp.lt.s32.totalorder %s14, 3
      %p194 = pnand %p192, %p193
      %p195 = pneg %p194
      // Predicated region
      $region9: #{tpu_custom_call.1} parent=5 // pred_check
        _
      $region10: #{tpu_custom_call.1} parent=5 // pred_check_branch
        %197 = sbr.rel (%p194) target = $region12
      $region11: #{tpu_custom_call.1} parent=5 // pred_region
        %s198 = ssub.s32 %s14, 1
        // Predicated region
        $region13: #{tpu_custom_call.1} parent=11 // pred_check
          %p199 = pneg %p78
        $region14: #{tpu_custom_call.1} parent=11 // pred_check_branch
          %201 = sbr.rel (%p199) target = $region16
        $region15: #{tpu_custom_call.1} parent=11 // pred_region
          %p202 = scmp.lt.s32.totalorder %s23, 0
          %s203 = scalar_select %p202, %s23, 0
          %s204 = smul.addr %s203, 8
          %s205 = scalar_lea.vmem %s1, %s204
        $region16: #{tpu_custom_call.1} parent=11 // pred_fallthru
          _
        // Predicated region
        $region17: #{tpu_custom_call.1} parent=11 // pred_check
          %p206 = pneg %p104
        $region18: #{tpu_custom_call.1} parent=11 // pred_check_branch
          %208 = sbr.rel (%p206) target = $region20
        $region19: #{tpu_custom_call.1} parent=11 // pred_region
          %p209 = scmp.lt.s32.totalorder %s23, 0
          %s210 = scalar_select %p209, %s23, 0
          %s211 = scalar_lea.vmem %s2, %s210
        $region20: #{tpu_custom_call.1} parent=11 // pred_fallthru
          _
        // Predicated region
        $region21: #{tpu_custom_call.1} parent=11 // pred_check
          %p212 = pneg %p130
        $region22: #{tpu_custom_call.1} parent=11 // pred_check_branch
          %214 = sbr.rel (%p212) target = $region24
        $region23: #{tpu_custom_call.1} parent=11 // pred_region
          %p215 = scmp.lt.s32.totalorder %s23, 0
          %s216 = scalar_select %p215, %s23, 0
          %s217 = scalar_lea.vmem %s3, %s216
        $region24: #{tpu_custom_call.1} parent=11 // pred_fallthru
          _
        // Predicated region
        $region25: #{tpu_custom_call.1} parent=11 // pred_check
          %p218 = pneg %p156
        $region26: #{tpu_custom_call.1} parent=11 // pred_check_branch
          %220 = sbr.rel (%p218) target = $region28
        $region27: #{tpu_custom_call.1} parent=11 // pred_region
          %p221 = scmp.lt.s32.totalorder %s23, 0
          %s222 = scalar_select %p221, %s23, 0
          %s223 = scalar_lea.vmem %s4, %s222
        $region28: #{tpu_custom_call.1} parent=11 // pred_fallthru
          _
      $region12: #{tpu_custom_call.1} parent=5 // pred_fallthru
        _
      %p224 = scmp.lt.s32.totalorder %s14, 2
      // Predicated region
      $region29: #{tpu_custom_call.1} parent=5 // pred_check
        %p225 = pneg %p224
      $region30: #{tpu_custom_call.1} parent=5 // pred_check_branch
        %227 = sbr.rel (%p225) target = $region32
      $region31: #{tpu_custom_call.1} parent=5 // pred_region
        // Predicated region
        $region33: #{tpu_custom_call.1} parent=31 // pred_check
          %p228 = pneg %p46
        $region34: #{tpu_custom_call.1} parent=31 // pred_check_branch
          %230 = sbr.rel (%p228) target = $region36
        $region35: #{tpu_custom_call.1} parent=31 // pred_region
          %s231 = smul.u32 2, %s22
          %p232 = scmp.lt.s32.totalorder %s231, 3
          %s233 = scalar_select %p232, %s231, 3
          %s234 = smul.addr %s233, 8
          %s235 = scalar_lea.vmem %s0, %s234
          %s236 = smul.u32 2, %s22
        $region36: #{tpu_custom_call.1} parent=31 // pred_fallthru
          _
      $region32: #{tpu_custom_call.1} parent=5 // pred_fallthru
        _
      %p237 = scmp.le.s32.totalorder 1, %s14
      %p238 = scmp.lt.s32.totalorder %s14, 3
      %p239 = pnand %p237, %p238
      %p240 = pneg %p239
      // Predicated region
      $region37: #{tpu_custom_call.1} parent=5 // pred_check
        _
      $region38: #{tpu_custom_call.1} parent=5 // pred_check_branch
        %242 = sbr.rel (%p239) target = $region40
      $region39: #{tpu_custom_call.1} parent=5 // pred_region
        %s243 = ssub.s32 %s14, 1
        %s244 = smul.u32 2, %s24
        %p245 = scmp.lt.s32.totalorder %s244, 3
        %s246 = scalar_select %p245, %s244, 3
        %s247 = smul.addr %s246, 8
        %s248 = scalar_lea.vmem %s0, %s247
        %p249 = pneg %p52
        %p250 = pneg %p49
        %p251 = scmp.lt.s32.totalorder %s23, 0
        %s252 = scalar_select %p251, %s23, 0
        %s253 = smul.addr %s252, 8
        %s254 = scalar_lea.vmem %s1, %s253
        %p255 = pneg %p78
        %p256 = pneg %p75
        %p257 = scmp.lt.s32.totalorder %s23, 0
        %s258 = scalar_select %p257, %s23, 0
        %s259 = scalar_lea.vmem %s2, %s258
        %p260 = pneg %p104
        %p261 = pneg %p101
        %p262 = scmp.lt.s32.totalorder %s23, 0
        %s263 = scalar_select %p262, %s23, 0
        %s264 = scalar_lea.vmem %s3, %s263
        %p265 = pneg %p130
        %p266 = pneg %p127
        %p267 = scmp.lt.s32.totalorder %s23, 0
        %s268 = scalar_select %p267, %s23, 0
        %s269 = scalar_lea.vmem %s4, %s268
        %p270 = pneg %p156
        %p271 = pneg %p153
        %p272 = pneg %p184
        %p273 = pneg %p181
        %s274 = sand.u32 %s171, 1
        %s275 = scalar_lea.sflag [#allocation3], %s274
        %s276 = sand.u32 %s171, 1
        %s277 = smul.addr %s276, 16
        %s278 = scalar_lea.vmem [#allocation2], %s277
        %s279 = smul.u32 2, %s24
        %p280 = scmp.lt.s32.totalorder %s279, 3
        %s281 = scalar_select %p280, %s279, 3
        %s282 = smul.addr %s281, 8
        %s283 = scalar_lea.vmem %s0, %s282
        %s284 = smul.u32 2, %s24
        %p285 = scmp.lt.s32.totalorder %s23, 0
        %s286 = scalar_select %p285, %s23, 0
        %s287 = smul.addr %s286, 8
        %s288 = scalar_lea.vmem %s1, %s287
        %p289 = scmp.lt.s32.totalorder %s23, 0
        %s290 = scalar_select %p289, %s23, 0
        %s291 = scalar_lea.vmem %s2, %s290
        %p292 = scmp.lt.s32.totalorder %s23, 0
        %s293 = scalar_select %p292, %s23, 0
        %s294 = scalar_lea.vmem %s3, %s293
        %p295 = scmp.lt.s32.totalorder %s23, 0
        %s296 = scalar_select %p295, %s23, 0
        %s297 = scalar_lea.vmem %s4, %s296
        %s298 = smul.u32 2, %s24
        %v299 = vld [vmem:[%s283] sm:$0xff]
        %v300 = vld [vmem:[%s283 + $0x8] sm:$0xff]
        %v301 = vld [vmem:[%s288] sm:$0xff]
        %v302 = vld [vmem:[%s288 + $0x8] sm:$0x3]
        %vm303 = vcmask 80896
        %v305 = vsel %vm303, %v299, 0
        %v308 = vsel %vm303, %v300, 0
        %vm310 = vcmask 1041408
        %v312 = vsel %vm310, %v302, 0
        %314 = vmatpush.msra.mxu0 0.0
        %315 = vmatpush.msra.mxu0 0.0
        %316 = vmatpush.msra.mxu0 0.0
        %317 = vmatpush.msra.mxu0 0.0
        %318 = vmatpush.msra.mxu0 0.0
        %319 = vmatpush.msra.mxu0 0.0
        %320 = vmatpush.msra.mxu0 0.0
        %321 = vmatpush.msra.mxu0 0.0
        %322 = vmatpush.msra.mxu0 0.0
        %323 = vmatpush.msra.mxu0 0.0
        %324 = vmatpush.msra.mxu0 0.0
        %325 = vmatpush.msra.mxu0 0.0
        %326 = vmatpush.msra.mxu0 0.0
        %327 = vmatpush.msra.mxu0 0.0
        %v328 = vand.u32 %v312, 4294901760
        %329 = vmatpush.msra.mxu0 %v328
        %v330 = vand.u32 %v301, 4294901760
        %331 = vmatpush.msra.mxu0 %v330
        %v332 = vand.u32 %v305, 4294901760
        %v333 = vsub.f32 %v305, %v332
        %v334 = vand.u32 %v333, 4294901760
        %v335 = vsub.f32 %v333, %v334
        %v336 = vand.u32 %v335, 4294901760
        %337 = vmatmul.f32.gmra.mxu0 %v336
        %v338 = vpop.f32.mrf.mxu0
        %v339 = vadd.f32 0.0, %v338
        %v340 = vand.u32 %v308, 4294901760
        %v341 = vsub.f32 %v308, %v340
        %v342 = vand.u32 %v341, 4294901760
        %v343 = vsub.f32 %v341, %v342
        %v344 = vand.u32 %v343, 4294901760
        %345 = vmatmul.f32.gmra.mxu0 %v344
        %v346 = vpop.f32.mrf.mxu0
        %v347 = vadd.f32 0.0, %v346
        %348 = vdwg.mxu0
        %349 = vmatpush.msra.mxu0 0.0
        %350 = vmatpush.msra.mxu0 0.0
        %351 = vmatpush.msra.mxu0 0.0
        %352 = vmatpush.msra.mxu0 0.0
        %353 = vmatpush.msra.mxu0 0.0
        %354 = vmatpush.msra.mxu0 0.0
        %355 = vmatpush.msra.mxu0 0.0
        %356 = vmatpush.msra.mxu0 0.0
        %357 = vmatpush.msra.mxu0 0.0
        %358 = vmatpush.msra.mxu0 0.0
        %359 = vmatpush.msra.mxu0 0.0
        %360 = vmatpush.msra.mxu0 0.0
        %361 = vmatpush.msra.mxu0 0.0
        %362 = vmatpush.msra.mxu0 0.0
        %v363 = vand.u32 %v312, 4294901760
        %v364 = vsub.f32 %v312, %v363
        %v365 = vand.u32 %v364, 4294901760
        %v366 = vsub.f32 %v364, %v365
        %v367 = vand.u32 %v366, 4294901760
        %368 = vmatpush.msra.mxu0 %v367
        %v369 = vand.u32 %v301, 4294901760
        %v370 = vsub.f32 %v301, %v369
        %v371 = vand.u32 %v370, 4294901760
        %v372 = vsub.f32 %v370, %v371
        %v373 = vand.u32 %v372, 4294901760
        %374 = vmatpush.msra.mxu0 %v373
        %v375 = vand.u32 %v305, 4294901760
        %376 = vmatmul.f32.gmra.mxu0 %v375
        %v377 = vpop.f32.mrf.mxu0
        %v378 = vadd.f32 %v339, %v377
        %v379 = vand.u32 %v308, 4294901760
        %380 = vmatmul.f32.gmra.mxu0 %v379
        %v381 = vpop.f32.mrf.mxu0
        %v382 = vadd.f32 %v347, %v381
        %383 = vdwg.mxu0
        %384 = vmatpush.msra.mxu0 0.0
        %385 = vmatpush.msra.mxu0 0.0
        %386 = vmatpush.msra.mxu0 0.0
        %387 = vmatpush.msra.mxu0 0.0
        %388 = vmatpush.msra.mxu0 0.0
        %389 = vmatpush.msra.mxu0 0.0
        %390 = vmatpush.msra.mxu0 0.0
        %391 = vmatpush.msra.mxu0 0.0
        %392 = vmatpush.msra.mxu0 0.0
        %393 = vmatpush.msra.mxu0 0.0
        %394 = vmatpush.msra.mxu0 0.0
        %395 = vmatpush.msra.mxu0 0.0
        %396 = vmatpush.msra.mxu0 0.0
        %397 = vmatpush.msra.mxu0 0.0
        %v398 = vand.u32 %v312, 4294901760
        %v399 = vsub.f32 %v312, %v398
        %400 = vmatpush.msra.mxu0 %v399
        %v401 = vand.u32 %v301, 4294901760
        %v402 = vsub.f32 %v301, %v401
        %403 = vmatpush.msra.mxu0 %v402
        %v404 = vand.u32 %v305, 4294901760
        %v405 = vsub.f32 %v305, %v404
        %406 = vmatmul.f32.gmra.mxu0 %v405
        %v407 = vpop.f32.mrf.mxu0
        %v408 = vadd.f32 %v378, %v407
        %v409 = vand.u32 %v308, 4294901760
        %v410 = vsub.f32 %v308, %v409
        %411 = vmatmul.f32.gmra.mxu0 %v410
        %v412 = vpop.f32.mrf.mxu0
        %v413 = vadd.f32 %v382, %v412
        %414 = vdwg.mxu0
        %415 = vmatpush.msra.mxu0 0.0
        %416 = vmatpush.msra.mxu0 0.0
        %417 = vmatpush.msra.mxu0 0.0
        %418 = vmatpush.msra.mxu0 0.0
        %419 = vmatpush.msra.mxu0 0.0
        %420 = vmatpush.msra.mxu0 0.0
        %421 = vmatpush.msra.mxu0 0.0
        %422 = vmatpush.msra.mxu0 0.0
        %423 = vmatpush.msra.mxu0 0.0
        %424 = vmatpush.msra.mxu0 0.0
        %425 = vmatpush.msra.mxu0 0.0
        %426 = vmatpush.msra.mxu0 0.0
        %427 = vmatpush.msra.mxu0 0.0
        %428 = vmatpush.msra.mxu0 0.0
        %v429 = vand.u32 %v312, 4294901760
        %430 = vmatpush.msra.mxu0 %v429
        %v431 = vand.u32 %v301, 4294901760
        %432 = vmatpush.msra.mxu0 %v431
        %v433 = vand.u32 %v305, 4294901760
        %v434 = vsub.f32 %v305, %v433
        %v435 = vand.u32 %v434, 4294901760
        %436 = vmatmul.f32.gmra.mxu0 %v435
        %v437 = vpop.f32.mrf.mxu0
        %v438 = vadd.f32 %v408, %v437
        %v439 = vand.u32 %v308, 4294901760
        %v440 = vsub.f32 %v308, %v439
        %v441 = vand.u32 %v440, 4294901760
        %442 = vmatmul.f32.gmra.mxu0 %v441
        %v443 = vpop.f32.mrf.mxu0
        %v444 = vadd.f32 %v413, %v443
        %445 = vdwg.mxu0
        %446 = vmatpush.msra.mxu0 0.0
        %447 = vmatpush.msra.mxu0 0.0
        %448 = vmatpush.msra.mxu0 0.0
        %449 = vmatpush.msra.mxu0 0.0
        %450 = vmatpush.msra.mxu0 0.0
        %451 = vmatpush.msra.mxu0 0.0
        %452 = vmatpush.msra.mxu0 0.0
        %453 = vmatpush.msra.mxu0 0.0
        %454 = vmatpush.msra.mxu0 0.0
        %455 = vmatpush.msra.mxu0 0.0
        %456 = vmatpush.msra.mxu0 0.0
        %457 = vmatpush.msra.mxu0 0.0
        %458 = vmatpush.msra.mxu0 0.0
        %459 = vmatpush.msra.mxu0 0.0
        %v460 = vand.u32 %v312, 4294901760
        %v461 = vsub.f32 %v312, %v460
        %v462 = vand.u32 %v461, 4294901760
        %463 = vmatpush.msra.mxu0 %v462
        %v464 = vand.u32 %v301, 4294901760
        %v465 = vsub.f32 %v301, %v464
        %v466 = vand.u32 %v465, 4294901760
        %467 = vmatpush.msra.mxu0 %v466
        %v468 = vand.u32 %v305, 4294901760
        %469 = vmatmul.f32.gmra.mxu0 %v468
        %v470 = vpop.f32.mrf.mxu0
        %v471 = vadd.f32 %v438, %v470
        %v472 = vand.u32 %v308, 4294901760
        %473 = vmatmul.f32.gmra.mxu0 %v472
        %v474 = vpop.f32.mrf.mxu0
        %v475 = vadd.f32 %v444, %v474
        %476 = vdwg.mxu0
        %477 = vmatpush.msra.mxu0 0.0
        %478 = vmatpush.msra.mxu0 0.0
        %479 = vmatpush.msra.mxu0 0.0
        %480 = vmatpush.msra.mxu0 0.0
        %481 = vmatpush.msra.mxu0 0.0
        %482 = vmatpush.msra.mxu0 0.0
        %483 = vmatpush.msra.mxu0 0.0
        %484 = vmatpush.msra.mxu0 0.0
        %485 = vmatpush.msra.mxu0 0.0
        %486 = vmatpush.msra.mxu0 0.0
        %487 = vmatpush.msra.mxu0 0.0
        %488 = vmatpush.msra.mxu0 0.0
        %489 = vmatpush.msra.mxu0 0.0
        %490 = vmatpush.msra.mxu0 0.0
        %v491 = vand.u32 %v312, 4294901760
        %492 = vmatpush.msra.mxu0 %v491
        %v493 = vand.u32 %v301, 4294901760
        %494 = vmatpush.msra.mxu0 %v493
        %v495 = vand.u32 %v305, 4294901760
        %496 = vmatmul.f32.gmra.mxu0 %v495
        %v497 = vpop.f32.mrf.mxu0
        %v498 = vadd.f32 %v471, %v497
        %v499 = vand.u32 %v308, 4294901760
        %500 = vmatmul.f32.gmra.mxu0 %v499
        %v501 = vpop.f32.mrf.mxu0
        %v502 = vadd.f32 %v475, %v501
        %503 = vdwg.mxu0
        %v504 = vld [vmem:[%s291] sm:$0x1]
        %v506 = vperm.slane %v504, 0
        %vm508 = vcmp.gt.f32.partialorder %v498, %v506
        %vm509 = vcmp.gt.f32.partialorder %v502, %v506
        %v510 = vsel %vm508, 1, 0
        %v511 = vsel %vm509, 1, 0
        %v512 = vcvt.s32.f32 %v510
        %v513 = vcvt.s32.f32 %v511
        %v514 = vld [vmem:[%s297] sm:$0x1]
        %v515 = vmul.f32 %v514, 2.0
        %v516 = vsub.f32 1.0, %v515
        %v518 = vperm.slane %v516, 0
        %v520 = vmul.f32 %v518, %v512
        %v521 = vmul.f32 %v518, %v513
        %v523 = vperm.slane %v514, 0
        %v525 = vadd.f32 %v523, %v520
        %v526 = vadd.f32 %v523, %v521
        %v527 = vld [vmem:[%s294] sm:$0x1]
        %v529 = vperm.slane %v527, 0
        %v531 = vmul.f32 %v529, %v498
        %v532 = vmul.f32 %v529, %v502
        %v533 = vsub.f32 1.0, %v527
        %v535 = vperm.slane %v533, 0
        %v537 = vmul.f32 %v535, %v525
        %v538 = vmul.f32 %v535, %v526
        %v539 = vadd.f32 %v531, %v537
        %v540 = vadd.f32 %v532, %v538
        %vm541 = vcmask 326656
        %542 = vst.msk [vmem:[%s278] sm:$0xff] %vm541, %v539
        %543 = vst.msk [vmem:[%s278 + $0x8] sm:$0xff] %vm541, %v540
        %p544 = scmp.eq.s32.totalorder %s23, 0
        // Predicated region
        $region41: #{tpu_custom_call.1} parent=39 // pred_check
          %p545 = pneg %p544
        $region42: #{tpu_custom_call.1} parent=39 // pred_check_branch
          %547 = sbr.rel (%p545) target = $region44
        $region43: #{tpu_custom_call.1} parent=39 // pred_region
          %v548 = vld [vmem:[%s283] sm:$0xff]
          %v549 = vld [vmem:[%s283 + $0x8] sm:$0xff]
          %vm550 = vcmask 31744
          %551 = vst.msk [vmem:[%s278] sm:$0xff] %vm550, %v548
          %552 = vst.msk [vmem:[%s278 + $0x8] sm:$0xff] %vm550, %v549
        $region44: #{tpu_custom_call.1} parent=39 // pred_fallthru
          _
        %s553 = sand.u32 %s171, 1
        %s554 = scalar_lea.sflag [#allocation3], %s553
        %s555 = sand.u32 %s171, 1
        %s556 = smul.addr %s555, 16
        %s557 = scalar_lea.vmem [#allocation2], %s556
        // Predicated region
        $region45: #{tpu_custom_call.1} parent=39 // pred_check
          %p558 = pneg %p181
        $region46: #{tpu_custom_call.1} parent=39 // pred_check_branch
          %560 = sbr.rel (%p558) target = $region48
        $region47: #{tpu_custom_call.1} parent=39 // pred_region
          %s561 = smul.u32 2, %s24
          %563 = vsyncadd %s554, 0
          %s564 = sadd.s32 %s23, %s561
          %s565 = smul.addr %s564, 8
          %s566 = scalar_lea.hbm %s5, %s565
          %s567 = sshll.u32 %s557, 4
          %s568 = int_to_ptr.vmem [resolvable:$true] %s567
          %s569 = sshll.u32 %s566, 4
          %s570 = int_to_ptr.hbm [resolvable:$true] %s569
          %575 = dma.vmem_to_hbm [thread:$0]  %s568, 256, %s570, %s554, 128, 128, 8
        $region48: #{tpu_custom_call.1} parent=39 // pred_fallthru
          _
      $region40: #{tpu_custom_call.1} parent=5 // pred_fallthru
        _
      %p576 = scmp.le.s32.totalorder 2, %s14
      // Predicated region
      $region49: #{tpu_custom_call.1} parent=5 // pred_check
        %p577 = pneg %p576
      $region50: #{tpu_custom_call.1} parent=5 // pred_check_branch
        %579 = sbr.rel (%p577) target = $region52
      $region51: #{tpu_custom_call.1} parent=5 // pred_region
        %s580 = ssub.s32 %s14, 2
        // Predicated region
        $region53: #{tpu_custom_call.1} parent=51 // pred_check
          %p581 = pneg %p187
        $region54: #{tpu_custom_call.1} parent=51 // pred_check_branch
          %583 = sbr.rel (%p581) target = $region56
        $region55: #{tpu_custom_call.1} parent=51 // pred_region
          %s584 = sand.u32 %s172, 1
          %s585 = scalar_lea.sflag [#allocation3], %s584
          %s586 = sand.u32 %s172, 1
          %s587 = smul.addr %s586, 16
          %s588 = scalar_lea.vmem [#allocation2], %s587
          %590 = dma.done %s585, 256
        $region56: #{tpu_custom_call.1} parent=51 // pred_fallthru
          _
      $region52: #{tpu_custom_call.1} parent=5 // pred_fallthru
        _
    $region6: #{tpu_custom_call.1} parent=1 // loop_footer
      %s18 = sadd.s32 1, %s14
    $region7: #{tpu_custom_call.1} parent=1 // loop_footer_branch
      %13 = sbr.rel target = $region3
    $region8: #{tpu_custom_call.1} parent=1 // loop_exit
      _
    %591 = vsyncpa [#allocation3], 1
    %s592 = scalar_lea.sflag [#allocation3], 1
    %593 = vsyncpa %s592, 1

</llo_original>
